<compile_context>
chip_gen: v7x
topology: tpu7x:2x2x1
jax: 0.10.0
libtpu: 0.0.40
codegen_flags: <defaults>
</compile_context>

<pallas_src>
import jax
import jax.numpy as jnp
from jax.experimental import pallas as pl
from jax.experimental.pallas import tpu as pltpu

_EPS = 1e-5


def _round_up(n, m):
    return ((n + m - 1) // m) * m


def _ffn_kernel(x_ref, w1_ref, b1_ref, w2_ref, b2_ref,
                g1_ref, be1_ref, g2_ref, be2_ref, o_ref,
                s_ref, acc_ref):
    """Grid = (row_block i [parallel], dff_block k [arbitrary, last])."""
    k = pl.program_id(1)
    nk = pl.num_programs(1)
    mxu_dtype = w1_ref.dtype                      # bf16 weights -> bf16 MXU inputs

    # --- first dff block of this row tile: residual + LayerNorm1, init accumulator ---
    @pl.when(k == 0)
    def _():
        x = x_ref[...].astype(jnp.float32)        # (TM, D)
        s = x + x                                 # src + dropout1(src), dropout = identity
        mu = jnp.mean(s, axis=-1, keepdims=True)
        c = s - mu
        var = jnp.mean(c * c, axis=-1, keepdims=True)      # two-pass stats (stable)
        g1 = g1_ref[...].astype(jnp.float32)
        be1 = be1_ref[...].astype(jnp.float32)
        s_ref[...] = c * jax.lax.rsqrt(var + _EPS) * g1 + be1
        acc_ref[...] = jnp.zeros_like(acc_ref)

    # --- every dff block: h_blk = relu(s @ W1[:, kb] + b1[kb]); acc += h_blk @ W2[kb, :] ---
    s_bf = s_ref[...].astype(mxu_dtype)           # (TM, D) bf16 for the MXU
    b1 = b1_ref[...].astype(jnp.float32)          # (1, dff_blk)
    h = jnp.dot(s_bf, w1_ref[...], preferred_element_type=jnp.float32) + b1
    h = jnp.maximum(h, 0.0)
    acc_ref[...] += jnp.dot(h.astype(mxu_dtype), w2_ref[...],
                            preferred_element_type=jnp.float32)

    # --- last dff block: bias2 + residual + LayerNorm2, store ---
    @pl.when(k == nk - 1)
    def _():
        b2 = b2_ref[...].astype(jnp.float32)
        g2 = g2_ref[...].astype(jnp.float32)
        be2 = be2_ref[...].astype(jnp.float32)
        y = s_ref[...] + acc_ref[...] + b2
        mu2 = jnp.mean(y, axis=-1, keepdims=True)
        c2 = y - mu2
        var2 = jnp.mean(c2 * c2, axis=-1, keepdims=True)
        o_ref[...] = (c2 * jax.lax.rsqrt(var2 + _EPS) * g2 + be2).astype(o_ref.dtype)


def feed_forward_network(x, params, *, block_rows=1024, block_dff=1024):
    """x: (..., d_model), any float dtype (f32 or bf16). Returns same shape/dtype."""
    w1, b1, w2, b2, g1, be1, g2, be2 = params
    orig_shape = x.shape
    d_model = orig_shape[-1]
    dff = w1.shape[1]

    x2d = x.reshape(-1, d_model)                  # (N, D); no padding copy (Pallas masks OOB)
    n_rows = x2d.shape[0]

    # --- dff block size: largest "nice" multiple of 128 that divides dff (else full dff) ---
    dff_blk = dff
    for cand in (2048, 1024, 512, 256, 128):
        if cand <= block_dff and dff % cand == 0:
            dff_blk = cand
            break
    n_dff_blocks = dff // dff_blk

    # --- generation-aware VMEM budget ---
    try:
        vmem_cap = int(pltpu.get_tpu_info().vmem_capacity_bytes)
    except Exception:
        vmem_cap = 64 * 1024 * 1024
    vmem_limit = int(min(max(vmem_cap - (8 << 20), 32 << 20), 120 << 20))

    in_isz = jnp.dtype(x2d.dtype).itemsize
    w_isz = jnp.dtype(w1.dtype).itemsize
    fixed = (2 * d_model * dff_blk * w_isz        # W1 block (double buffered)
             + 2 * dff_blk * d_model * w_isz      # W2 block (double buffered)
             + 2 * 8 * dff_blk * w_isz            # b1 block (sublane padded)
             + 6 * 8 * d_model * 4                # b2 / gamma / beta blocks
             + (2 << 20))                         # compiler-internal scratch headroom
    per_row = (d_model * (2 * in_isz              # x tile (double buffered)
                          + 2 * in_isz            # out tile (double buffered)
                          + 4 + 4                 # s scratch + acc scratch (f32)
                          + 2)                    # bf16 cast of s before the MXU
               + dff_blk * (4 + 2))               # h (f32) + bf16 cast of h

    budget = max(vmem_limit - fixed, per_row * 8)
    tm_vmem_cap = max(8, (budget // per_row) // 8 * 8)

    # --- keep >= ~4 row steps so both v7x TensorCores get work and DMA overlaps compute ---
    target_steps = 4
    tm_step_cap = _round_up(max(pl.cdiv(n_rows, target_steps), 1), 8)

    block_rows = max(8, (block_rows // 8) * 8)
    tm = max(8, min(block_rows, tm_vmem_cap, tm_step_cap, _round_up(n_rows, 8)))

    grid = (pl.cdiv(n_rows, tm), n_dff_blocks)

    row_spec = pl.BlockSpec((tm, d_model), lambda i, k: (i, 0))     # revisited across k
    w1_spec = pl.BlockSpec((d_model, dff_blk), lambda i, k: (0, k))
    b1_spec = pl.BlockSpec((1, dff_blk), lambda i, k: (0, k))
    w2_spec = pl.BlockSpec((dff_blk, d_model), lambda i, k: (k, 0))
    vec_spec = pl.BlockSpec((1, d_model), lambda i, k: (0, 0))      # grid-invariant, tiny

    out2d = pl.pallas_call(
        _ffn_kernel,
        out_shape=jax.ShapeDtypeStruct((n_rows, d_model), x.dtype),
        grid=grid,
        in_specs=[
            row_spec,    # x        (TM, D)
            w1_spec,     # W1 block (D, dff_blk)
            b1_spec,     # b1 block (1, dff_blk)
            w2_spec,     # W2 block (dff_blk, D)
            vec_spec,    # b2
            vec_spec,    # gamma1
            vec_spec,    # beta1
            vec_spec,    # gamma2
            vec_spec,    # beta2
        ],
        out_specs=row_spec,
        scratch_shapes=[
            pltpu.VMEM((tm, d_model), jnp.float32),   # s  = LN1(2x), reused across dff blocks
            pltpu.VMEM((tm, d_model), jnp.float32),   # acc = running sum of h @ W2 blocks
        ],
        compiler_params=pltpu.CompilerParams(
            dimension_semantics=("parallel", "arbitrary"),
            vmem_limit_bytes=vmem_limit),
    )(x2d, w1, b1, w2, b2, g1, be1, g2, be2)

    return out2d.reshape(orig_shape)


def init_params(key, d_model, dim_feedforward, param_dtype=jnp.bfloat16):
    """nn.Linear default init U(-1/sqrt(fan_in), ..), weights stored transposed (in, out),
    matmul weights/biases in bf16 (MXU-native); LayerNorm params in f32."""
    k1, k2, k3, k4 = jax.random.split(key, 4)
    lim1 = 1.0 / (d_model ** 0.5)
    lim2 = 1.0 / (dim_feedforward ** 0.5)
    w1 = jax.random.uniform(k1, (d_model, dim_feedforward), jnp.float32, -lim1, lim1).astype(param_dtype)
    b1 = jax.random.uniform(k2, (1, dim_feedforward), jnp.float32, -lim1, lim1).astype(param_dtype)
    w2 = jax.random.uniform(k3, (dim_feedforward, d_model), jnp.float32, -lim2, lim2).astype(param_dtype)
    b2 = jax.random.uniform(k4, (1, d_model), jnp.float32, -lim2, lim2).astype(param_dtype)
    g1 = jnp.ones((1, d_model), jnp.float32)
    be1 = jnp.zeros((1, d_model), jnp.float32)
    g2 = jnp.ones((1, d_model), jnp.float32)
    be2 = jnp.zeros((1, d_model), jnp.float32)
    return (w1, b1, w2, b2, g1, be1, g2, be2)


def _reference(x, params):
    """Pure-JAX reference of the PyTorch forward (eval mode), bf16 MXU inputs + f32 accum."""
    w1, b1, w2, b2, g1, be1, g2, be2 = params

    def ln(v, g, b):
        mu = jnp.mean(v, axis=-1, keepdims=True)
        var = jnp.mean((v - mu) ** 2, axis=-1, keepdims=True)
        return (v - mu) / jnp.sqrt(var + _EPS) * g.reshape(-1) + b.reshape(-1)

    xf = x.astype(jnp.float32)
    s = xf + xf
    s = ln(s, g1, be1)
    h = jnp.dot(s.astype(w1.dtype), w1,
                preferred_element_type=jnp.float32) + b1.reshape(-1).astype(jnp.float32)
    h = jnp.maximum(h, 0.0)
    y2 = jnp.dot(h.astype(w2.dtype), w2,
                 preferred_element_type=jnp.float32) + b2.reshape(-1).astype(jnp.float32)
    return ln(s + y2, g2, be2).astype(x.dtype)


if __name__ == "__main__":
    # Small, 256-aligned demo shapes (v6e/v7x MXU is 256 wide).
    seq, batch, d_model, dff = 8, 2, 256, 512
    key = jax.random.PRNGKey(0)
    kx, kp = jax.random.split(key)

    x = jax.random.normal(kx, (seq, batch, d_model), jnp.float32)
    params = init_params(kp, d_model, dff)

    # block_dff=256 -> 2 dff blocks, exercising the streamed-accumulator path.
    out = feed_forward_network(x, params, block_dff=256)
    out = jax.block_until_ready(out)

    ref = _reference(x, params)
    assert out.shape == x.shape and out.dtype == x.dtype
    assert jnp.allclose(out, ref, atol=2e-2, rtol=2e-2), "mismatch vs reference"

    print("KERNEL_OK")
</pallas_src>

<mosaic_0001>
module attributes {stable_mosaic.version = 11 : i64} {
  func.func @_ffn_kernel(%arg0: i32, %arg1: i32, %arg2: memref<8x256xf32, #tpu.memory_space<vmem>>, %arg3: memref<256x256xbf16, #tpu.memory_space<vmem>>, %arg4: memref<1x256xbf16, #tpu.memory_space<vmem>>, %arg5: memref<256x256xbf16, #tpu.memory_space<vmem>>, %arg6: memref<1x256xbf16, #tpu.memory_space<vmem>>, %arg7: memref<1x256xf32, #tpu.memory_space<vmem>>, %arg8: memref<1x256xf32, #tpu.memory_space<vmem>>, %arg9: memref<1x256xf32, #tpu.memory_space<vmem>>, %arg10: memref<1x256xf32, #tpu.memory_space<vmem>>, %arg11: memref<8x256xf32, #tpu.memory_space<vmem>>, %arg12: memref<8x256xf32, #tpu.memory_space<vmem>>, %arg13: memref<8x256xf32, #tpu.memory_space<vmem>>) attributes {dimension_semantics = [#tpu.dimension_semantics<parallel>, #tpu.dimension_semantics<arbitrary>], iteration_bounds = array<i64: 2, 2>, scalar_prefetch = 0 : i64, scratch_operands = 2 : i64, tpu.core_type = #tpu.core_type<tc>, window_params = [{transform_indices = @transform_0, window_bounds = array<i64: 8, 256>}, {transform_indices = @transform_1, window_bounds = array<i64: 256, 256>}, {transform_indices = @transform_2, window_bounds = array<i64: 1, 256>}, {transform_indices = @transform_3, window_bounds = array<i64: 256, 256>}, {pipeline_mode = #tpu.pipeline_mode<synchronous>, transform_indices = @transform_4, window_bounds = array<i64: 1, 256>}, {pipeline_mode = #tpu.pipeline_mode<synchronous>, transform_indices = @transform_5, window_bounds = array<i64: 1, 256>}, {pipeline_mode = #tpu.pipeline_mode<synchronous>, transform_indices = @transform_6, window_bounds = array<i64: 1, 256>}, {pipeline_mode = #tpu.pipeline_mode<synchronous>, transform_indices = @transform_7, window_bounds = array<i64: 1, 256>}, {pipeline_mode = #tpu.pipeline_mode<synchronous>, transform_indices = @transform_8, window_bounds = array<i64: 1, 256>}, {transform_indices = @transform_9, window_bounds = array<i64: 8, 256>}]} {
    %c0_i32 = arith.constant 0 : i32
    %0 = arith.cmpi eq, %arg1, %c0_i32 : i32
    %1 = arith.extui %0 : i1 to i32
    %c0_i32_0 = arith.constant 0 : i32
    %2 = arith.cmpi ne, %1, %c0_i32_0 : i32
    scf.if %2 {
      %c0_15 = arith.constant 0 : index
      %c0_16 = arith.constant 0 : index
      %22 = vector.load %arg2[%c0_15, %c0_16] : memref<8x256xf32, #tpu.memory_space<vmem>>, vector<8x256xf32>
      %23 = arith.addf %22, %22 : vector<8x256xf32>
      %cst_17 = arith.constant dense<0.000000e+00> : vector<8xf32>
      %24 = vector.multi_reduction <add>, %23, %cst_17 [1] : vector<8x256xf32> to vector<8xf32>
      %25 = vector.shape_cast %24 : vector<8xf32> to vector<8x1xf32>
      %cst_18 = arith.constant 2.560000e+02 : f32
      %26 = vector.broadcast %cst_18 : f32 to vector<8x1xf32>
      %27 = arith.divf %25, %26 : vector<8x1xf32>
      %28 = vector.broadcast %27 : vector<8x1xf32> to vector<8x256xf32>
      %29 = arith.subf %23, %28 : vector<8x256xf32>
      %30 = arith.mulf %29, %29 : vector<8x256xf32>
      %cst_19 = arith.constant dense<0.000000e+00> : vector<8xf32>
      %31 = vector.multi_reduction <add>, %30, %cst_19 [1] : vector<8x256xf32> to vector<8xf32>
      %32 = vector.shape_cast %31 : vector<8xf32> to vector<8x1xf32>
      %cst_20 = arith.constant 2.560000e+02 : f32
      %33 = vector.broadcast %cst_20 : f32 to vector<8x1xf32>
      %34 = arith.divf %32, %33 : vector<8x1xf32>
      %c0_21 = arith.constant 0 : index
      %c0_22 = arith.constant 0 : index
      %35 = vector.load %arg7[%c0_21, %c0_22] : memref<1x256xf32, #tpu.memory_space<vmem>>, vector<1x256xf32>
      %c0_23 = arith.constant 0 : index
      %c0_24 = arith.constant 0 : index
      %36 = vector.load %arg8[%c0_23, %c0_24] : memref<1x256xf32, #tpu.memory_space<vmem>>, vector<1x256xf32>
      %cst_25 = arith.constant 9.99999974E-6 : f32
      %37 = vector.broadcast %cst_25 : f32 to vector<8x1xf32>
      %38 = arith.addf %34, %37 : vector<8x1xf32>
      %39 = math.rsqrt %38 : vector<8x1xf32>
      %40 = vector.broadcast %39 : vector<8x1xf32> to vector<8x256xf32>
      %41 = arith.mulf %29, %40 : vector<8x256xf32>
      %42 = vector.broadcast %35 : vector<1x256xf32> to vector<8x256xf32>
      %43 = arith.mulf %41, %42 : vector<8x256xf32>
      %44 = vector.broadcast %36 : vector<1x256xf32> to vector<8x256xf32>
      %45 = arith.addf %43, %44 : vector<8x256xf32>
      %c0_26 = arith.constant 0 : index
      %c0_27 = arith.constant 0 : index
      %46 = vector.load %arg12[%c0_26, %c0_27] : memref<8x256xf32, #tpu.memory_space<vmem>>, vector<8x256xf32>
      tpu.vector_store %arg12[%c0_26, %c0_27], %45 {strides = array<i32>} : memref<8x256xf32, #tpu.memory_space<vmem>>, vector<8x256xf32>,
      %cst_28 = arith.constant 0.000000e+00 : f32
      %47 = vector.broadcast %cst_28 : f32 to vector<8x256xf32>
      %c0_29 = arith.constant 0 : index
      %c0_30 = arith.constant 0 : index
      %48 = vector.load %arg13[%c0_29, %c0_30] : memref<8x256xf32, #tpu.memory_space<vmem>>, vector<8x256xf32>
      tpu.vector_store %arg13[%c0_29, %c0_30], %47 {strides = array<i32>} : memref<8x256xf32, #tpu.memory_space<vmem>>, vector<8x256xf32>,
    } else {
    }
    %c0 = arith.constant 0 : index
    %c0_1 = arith.constant 0 : index
    %3 = vector.load %arg12[%c0, %c0_1] : memref<8x256xf32, #tpu.memory_space<vmem>>, vector<8x256xf32>
    %4 = arith.truncf %3 : vector<8x256xf32> to vector<8x256xbf16>
    %c0_2 = arith.constant 0 : index
    %c0_3 = arith.constant 0 : index
    %5 = vector.load %arg4[%c0_2, %c0_3] : memref<1x256xbf16, #tpu.memory_space<vmem>>, vector<1x256xbf16>
    %6 = arith.extf %5 : vector<1x256xbf16> to vector<1x256xf32>
    %c0_4 = arith.constant 0 : index
    %c0_5 = arith.constant 0 : index
    %7 = vector.load %arg3[%c0_4, %c0_5] : memref<256x256xbf16, #tpu.memory_space<vmem>>, vector<256x256xbf16>
    %cst = arith.constant dense<0.000000e+00> : vector<8x256xf32>
    %8 = tpu.matmul %4, %7, %cst {dimension_numbers = #tpu.dot_dimension_numbers<[1], [0], [0], [1], [0, 0, 1, 1], [], []>} : vector<8x256xbf16>, vector<256x256xbf16>, vector<8x256xf32> -> vector<8x256xf32>
    %9 = vector.broadcast %6 : vector<1x256xf32> to vector<8x256xf32>
    %10 = arith.addf %8, %9 : vector<8x256xf32>
    %cst_6 = arith.constant 0.000000e+00 : f32
    %11 = vector.broadcast %cst_6 : f32 to vector<8x256xf32>
    %12 = arith.maximumf %10, %11 : vector<8x256xf32>
    %c0_7 = arith.constant 0 : index
    %c0_8 = arith.constant 0 : index
    %13 = vector.load %arg13[%c0_7, %c0_8] : memref<8x256xf32, #tpu.memory_space<vmem>>, vector<8x256xf32>
    %14 = arith.truncf %12 : vector<8x256xf32> to vector<8x256xbf16>
    %c0_9 = arith.constant 0 : index
    %c0_10 = arith.constant 0 : index
    %15 = vector.load %arg5[%c0_9, %c0_10] : memref<256x256xbf16, #tpu.memory_space<vmem>>, vector<256x256xbf16>
    %cst_11 = arith.constant dense<0.000000e+00> : vector<8x256xf32>
    %16 = tpu.matmul %14, %15, %cst_11 {dimension_numbers = #tpu.dot_dimension_numbers<[1], [0], [0], [1], [0, 0, 1, 1], [], []>} : vector<8x256xbf16>, vector<256x256xbf16>, vector<8x256xf32> -> vector<8x256xf32>
    %17 = arith.addf %13, %16 : vector<8x256xf32>
    %c0_12 = arith.constant 0 : index
    %c0_13 = arith.constant 0 : index
    %18 = vector.load %arg13[%c0_12, %c0_13] : memref<8x256xf32, #tpu.memory_space<vmem>>, vector<8x256xf32>
    tpu.vector_store %arg13[%c0_12, %c0_13], %17 {strides = array<i32>} : memref<8x256xf32, #tpu.memory_space<vmem>>, vector<8x256xf32>,
    %c1_i32 = arith.constant 1 : i32
    %19 = arith.cmpi eq, %arg1, %c1_i32 : i32
    %20 = arith.extui %19 : i1 to i32
    %c0_i32_14 = arith.constant 0 : i32
    %21 = arith.cmpi ne, %20, %c0_i32_14 : i32
    scf.if %21 {
      %c0_15 = arith.constant 0 : index
      %c0_16 = arith.constant 0 : index
      %22 = vector.load %arg6[%c0_15, %c0_16] : memref<1x256xbf16, #tpu.memory_space<vmem>>, vector<1x256xbf16>
      %23 = arith.extf %22 : vector<1x256xbf16> to vector<1x256xf32>
      %c0_17 = arith.constant 0 : index
      %c0_18 = arith.constant 0 : index
      %24 = vector.load %arg9[%c0_17, %c0_18] : memref<1x256xf32, #tpu.memory_space<vmem>>, vector<1x256xf32>
      %c0_19 = arith.constant 0 : index
      %c0_20 = arith.constant 0 : index
      %25 = vector.load %arg10[%c0_19, %c0_20] : memref<1x256xf32, #tpu.memory_space<vmem>>, vector<1x256xf32>
      %c0_21 = arith.constant 0 : index
      %c0_22 = arith.constant 0 : index
      %26 = vector.load %arg12[%c0_21, %c0_22] : memref<8x256xf32, #tpu.memory_space<vmem>>, vector<8x256xf32>
      %c0_23 = arith.constant 0 : index
      %c0_24 = arith.constant 0 : index
      %27 = vector.load %arg13[%c0_23, %c0_24] : memref<8x256xf32, #tpu.memory_space<vmem>>, vector<8x256xf32>
      %28 = arith.addf %26, %27 : vector<8x256xf32>
      %29 = vector.broadcast %23 : vector<1x256xf32> to vector<8x256xf32>
      %30 = arith.addf %28, %29 : vector<8x256xf32>
      %cst_25 = arith.constant dense<0.000000e+00> : vector<8xf32>
      %31 = vector.multi_reduction <add>, %30, %cst_25 [1] : vector<8x256xf32> to vector<8xf32>
      %32 = vector.shape_cast %31 : vector<8xf32> to vector<8x1xf32>
      %cst_26 = arith.constant 2.560000e+02 : f32
      %33 = vector.broadcast %cst_26 : f32 to vector<8x1xf32>
      %34 = arith.divf %32, %33 : vector<8x1xf32>
      %35 = vector.broadcast %34 : vector<8x1xf32> to vector<8x256xf32>
      %36 = arith.subf %30, %35 : vector<8x256xf32>
      %37 = arith.mulf %36, %36 : vector<8x256xf32>
      %cst_27 = arith.constant dense<0.000000e+00> : vector<8xf32>
      %38 = vector.multi_reduction <add>, %37, %cst_27 [1] : vector<8x256xf32> to vector<8xf32>
      %39 = vector.shape_cast %38 : vector<8xf32> to vector<8x1xf32>
      %cst_28 = arith.constant 2.560000e+02 : f32
      %40 = vector.broadcast %cst_28 : f32 to vector<8x1xf32>
      %41 = arith.divf %39, %40 : vector<8x1xf32>
      %cst_29 = arith.constant 9.99999974E-6 : f32
      %42 = vector.broadcast %cst_29 : f32 to vector<8x1xf32>
      %43 = arith.addf %41, %42 : vector<8x1xf32>
      %44 = math.rsqrt %43 : vector<8x1xf32>
      %45 = vector.broadcast %44 : vector<8x1xf32> to vector<8x256xf32>
      %46 = arith.mulf %36, %45 : vector<8x256xf32>
      %47 = vector.broadcast %24 : vector<1x256xf32> to vector<8x256xf32>
      %48 = arith.mulf %46, %47 : vector<8x256xf32>
      %49 = vector.broadcast %25 : vector<1x256xf32> to vector<8x256xf32>
      %50 = arith.addf %48, %49 : vector<8x256xf32>
      %c0_30 = arith.constant 0 : index
      %c0_31 = arith.constant 0 : index
      %51 = vector.load %arg11[%c0_30, %c0_31] : memref<8x256xf32, #tpu.memory_space<vmem>>, vector<8x256xf32>
      tpu.vector_store %arg11[%c0_30, %c0_31], %50 {strides = array<i32>} : memref<8x256xf32, #tpu.memory_space<vmem>>, vector<8x256xf32>,
    } else {
    }
    return
  }
  func.func @transform_0(%arg0: i32, %arg1: i32) -> (i32, i32) {
    %c0_i32 = arith.constant 0 : i32
    %c0_i32_0 = arith.constant 0 : i32
    return %arg0, %c0_i32 : i32, i32
  }
  func.func @transform_1(%arg0: i32, %arg1: i32) -> (i32, i32) {
    %c0_i32 = arith.constant 0 : i32
    %c0_i32_0 = arith.constant 0 : i32
    return %c0_i32, %arg1 : i32, i32
  }
  func.func @transform_2(%arg0: i32, %arg1: i32) -> (i32, i32) {
    %c0_i32 = arith.constant 0 : i32
    %c0_i32_0 = arith.constant 0 : i32
    return %c0_i32, %arg1 : i32, i32
  }
  func.func @transform_3(%arg0: i32, %arg1: i32) -> (i32, i32) {
    %c0_i32 = arith.constant 0 : i32
    %c0_i32_0 = arith.constant 0 : i32
    return %arg1, %c0_i32 : i32, i32
  }
  func.func @transform_4(%arg0: i32, %arg1: i32) -> (i32, i32) {
    %c0_i32 = arith.constant 0 : i32
    %c0_i32_0 = arith.constant 0 : i32
    %c0_i32_1 = arith.constant 0 : i32
    return %c0_i32, %c0_i32_0 : i32, i32
  }
  func.func @transform_5(%arg0: i32, %arg1: i32) -> (i32, i32) {
    %c0_i32 = arith.constant 0 : i32
    %c0_i32_0 = arith.constant 0 : i32
    %c0_i32_1 = arith.constant 0 : i32
    return %c0_i32, %c0_i32_0 : i32, i32
  }
  func.func @transform_6(%arg0: i32, %arg1: i32) -> (i32, i32) {
    %c0_i32 = arith.constant 0 : i32
    %c0_i32_0 = arith.constant 0 : i32
    %c0_i32_1 = arith.constant 0 : i32
    return %c0_i32, %c0_i32_0 : i32, i32
  }
  func.func @transform_7(%arg0: i32, %arg1: i32) -> (i32, i32) {
    %c0_i32 = arith.constant 0 : i32
    %c0_i32_0 = arith.constant 0 : i32
    %c0_i32_1 = arith.constant 0 : i32
    return %c0_i32, %c0_i32_0 : i32, i32
  }
  func.func @transform_8(%arg0: i32, %arg1: i32) -> (i32, i32) {
    %c0_i32 = arith.constant 0 : i32
    %c0_i32_0 = arith.constant 0 : i32
    %c0_i32_1 = arith.constant 0 : i32
    return %c0_i32, %c0_i32_0 : i32, i32
  }
  func.func @transform_9(%arg0: i32, %arg1: i32) -> (i32, i32) {
    %c0_i32 = arith.constant 0 : i32
    %c0_i32_0 = arith.constant 0 : i32
    return %arg0, %c0_i32 : i32, i32
  }
}

</mosaic_0001>

<llo_original>
// kernel: tpu_custom_call.1
$region0: #{tpu_custom_call.1}
  #allocation0 [shape = 'u32[]', space=smem, size = 0x4, offset = 0x4, fixed_abs, tag = 'smem constant byte address 0x4 - core index']
  #allocation1 [shape = 'u32[144,128]{1,0:T(1,128)}', space=vmem, size = 0x12000, scoped, tag = 'internal scratch']
  #allocation2 [shape = 'f32[8,256]{1,0:T(8,128)}', space=vmem, size = 0x2000, scoped, tag = 'scratch operand']
  #allocation3 [shape = 'f32[8,256]{1,0:T(8,128)}', space=vmem, size = 0x2000, scoped, tag = 'scratch operand']
  %s0 = inlined_call_operand.hbm [shape: f32[16,256], index: 0, kind: input, shape index: {}]
  %s1 = inlined_call_operand.hbm [shape: bf16[256,512], index: 1, kind: input, shape index: {}]
  %s2 = inlined_call_operand.vmem [shape: bf16[1,512], index: 2, kind: input, shape index: {}]
  %s3 = inlined_call_operand.hbm [shape: bf16[512,256], index: 3, kind: input, shape index: {}]
  %s4 = inlined_call_operand.vmem [shape: bf16[1,256], index: 4, kind: input, shape index: {}]
  %s5 = inlined_call_operand.vmem [shape: f32[1,256], index: 5, kind: input, shape index: {}]
  %s6 = inlined_call_operand.vmem [shape: f32[1,256], index: 6, kind: input, shape index: {}]
  %s7 = inlined_call_operand.vmem [shape: f32[1,256], index: 7, kind: input, shape index: {}]
  %s8 = inlined_call_operand.vmem [shape: f32[1,256], index: 8, kind: input, shape index: {}]
  %s9 = inlined_call_operand.hbm [shape: f32[16,256], index: 9, kind: output, shape index: {}]
  %s10 = sld [smem:[#allocation0]]
  $region89: #{tpu_custom_call.1} parent=0
    _
  %s12 = ssub.s32 1, %s10
  %s13 = scalar_select 0, %s12, %s10
  $region1: #{tpu_custom_call.1} parent=0
    #allocation4 [shape = 'u8[16384]{0}', space=vmem, size = 0x4000, scoped, tag = 'input window, operand 0']
    #allocation5 [shape = 's32[2]{0}', space=sflag, size = 0x8, scoped, tag = 'scoped memory for tpu_custom_call.1']
    #allocation6 [shape = 's32[2]{0}', space=sflag, size = 0x8, scoped, tag = 'scoped memory for tpu_custom_call.1']
    #allocation7 [shape = 'u8[262144]{0}', space=vmem, size = 0x40000, scoped, tag = 'input window, operand 1']
    #allocation8 [shape = 's32[2]{0}', space=sflag, size = 0x8, scoped, tag = 'scoped memory for tpu_custom_call.1']
    #allocation9 [shape = 'u8[262144]{0}', space=vmem, size = 0x40000, scoped, tag = 'input window, operand 3']
    #allocation10 [shape = 'u8[16384]{0}', space=vmem, size = 0x4000, scoped, tag = 'output window, operand 0']
    %14 = vsyncpa [#allocation5], 0
    %s15 = scalar_lea.sflag [#allocation5], 1
    %16 = vsyncpa %s15, 0
    %17 = vsyncpa [#allocation8], 0
    %s18 = scalar_lea.sflag [#allocation8], 1
    %19 = vsyncpa %s18, 0
    %20 = vsyncpa [#allocation6], 0
    %s21 = scalar_lea.sflag [#allocation6], 1
    %22 = vsyncpa %s21, 0
    loop: start=0, step=1, limit=6
    $region2: #{tpu_custom_call.1} parent=1 // loop_pre_header
      _
    $region3: #{tpu_custom_call.1} parent=1 // loop_header
      %s24 = sphi 0, %s28
      %p25 = scmp.ge.s32.totalorder %s24, 6
      %s31 = sphi 0, %s43
      %s32 = sphi 0, %s39
      %s33 = sphi 0, %s31
      %s34 = sphi 0, %s32
      %s35 = sphi 0, %s33
      %s36 = sphi 0, %s34
      %s46 = sphi 0, %s48
      %s49 = sphi 0, %s46
      %s50 = sphi 0, %s49
      %s66 = sphi 0, %s50
      %s72 = sphi 0, %s74
      %s75 = sphi 0, %s72
      %s76 = sphi 0, %s75
      %s92 = sphi 0, %s76
      %s98 = sphi 0, %s100
      %s101 = sphi 0, %s98
      %s102 = sphi 0, %s101
      %s118 = sphi 0, %s102
      %s124 = sphi 0, %s126
      %s127 = sphi 0, %s124
      %s128 = sphi 0, %s127
      %s144 = sphi 0, %s128
      %s148 = sphi 0, %s148
      %s150 = sphi 0, %s148
      %s151 = sphi 0, %s150
      %s165 = sphi 0, %s151
      %s169 = sphi 0, %s169
      %s171 = sphi 0, %s169
      %s172 = sphi 0, %s171
      %s186 = sphi 0, %s172
      %s190 = sphi 0, %s190
      %s192 = sphi 0, %s190
      %s193 = sphi 0, %s192
      %s207 = sphi 0, %s193
      %s211 = sphi 0, %s211
      %s213 = sphi 0, %s211
      %s214 = sphi 0, %s213
      %s228 = sphi 0, %s214
      %s232 = sphi 0, %s232
      %s234 = sphi 0, %s232
      %s235 = sphi 0, %s234
      %s249 = sphi 0, %s235
      %s255 = sphi 0, %s257
      %s258 = sphi 0, %s255
      %s259 = sphi 0, %s258
      %s275 = sphi 0, %s259
    $region4: #{tpu_custom_call.1} parent=1 // loop_header_branch
      %27 = sbr.rel (%p25) target = $region8
    $region5: #{tpu_custom_call.1} parent=1 // loop_body
      %s29 = ssub.s32 %s24, 1
      %s30 = ssub.s32 %s24, 2
      %s37 = sadd.s32 1, %s32
      %p38 = scmp.ge.s32.totalorder %s37, 2
      %s39 = scalar_select %p38, 0, %s37
      %s40 = sadd.s32 1, %s31
      %s41 = scalar_select %p38, %s40, %s31
      %p42 = scmp.ge.s32.totalorder %s41, 2
      %s43 = scalar_select %p42, 0, %s41
      %s44 = ssub.s32 %s31, %s43
      %p45 = scmp.eq.s32.totalorder %s44, 0
      %s47 = sadd.s32 %s46, 1
      %s48 = scalar_select %p45, %s46, %s47
      %p51 = pneg %p45
      %p52 = scmp.eq.s32.totalorder %s24, 3
      %p53 = por %p51, %p52
      %p54 = scmp.ne.s32.totalorder %s46, %s49
      %p55 = scmp.eq.s32.totalorder %s24, 0
      %p56 = por %p54, %p55
      %p57 = scmp.ne.s32.totalorder %s46, %s49
      %p58 = scmp.eq.s32.totalorder %s29, 3
      %p59 = por %p57, %p58
      %p60 = scmp.ne.s32.totalorder %s49, %s50
      %p61 = scmp.eq.s32.totalorder %s29, 0
      %p62 = por %p60, %p61
      %p63 = scmp.ne.s32.totalorder %s49, %s50
      %p64 = scmp.eq.s32.totalorder %s30, 3
      %p65 = por %p63, %p64
      %p67 = scmp.ne.s32.totalorder %s50, %s66
      %p68 = scmp.eq.s32.totalorder %s30, 0
      %p69 = por %p67, %p68
      %s70 = ssub.s32 %s32, %s39
      %p71 = scmp.eq.s32.totalorder %s70, 0
      %s73 = sadd.s32 %s72, 1
      %s74 = scalar_select %p71, %s72, %s73
      %p77 = pneg %p71
      %p78 = scmp.eq.s32.totalorder %s24, 3
      %p79 = por %p77, %p78
      %p80 = scmp.ne.s32.totalorder %s72, %s75
      %p81 = scmp.eq.s32.totalorder %s24, 0
      %p82 = por %p80, %p81
      %p83 = scmp.ne.s32.totalorder %s72, %s75
      %p84 = scmp.eq.s32.totalorder %s29, 3
      %p85 = por %p83, %p84
      %p86 = scmp.ne.s32.totalorder %s75, %s76
      %p87 = scmp.eq.s32.totalorder %s29, 0
      %p88 = por %p86, %p87
      %p89 = scmp.ne.s32.totalorder %s75, %s76
      %p90 = scmp.eq.s32.totalorder %s30, 3
      %p91 = por %p89, %p90
      %p93 = scmp.ne.s32.totalorder %s76, %s92
      %p94 = scmp.eq.s32.totalorder %s30, 0
      %p95 = por %p93, %p94
      %s96 = ssub.s32 %s32, %s39
      %p97 = scmp.eq.s32.totalorder %s96, 0
      %s99 = sadd.s32 %s98, 1
      %s100 = scalar_select %p97, %s98, %s99
      %p103 = pneg %p97
      %p104 = scmp.eq.s32.totalorder %s24, 3
      %p105 = por %p103, %p104
      %p106 = scmp.ne.s32.totalorder %s98, %s101
      %p107 = scmp.eq.s32.totalorder %s24, 0
      %p108 = por %p106, %p107
      %p109 = scmp.ne.s32.totalorder %s98, %s101
      %p110 = scmp.eq.s32.totalorder %s29, 3
      %p111 = por %p109, %p110
      %p112 = scmp.ne.s32.totalorder %s101, %s102
      %p113 = scmp.eq.s32.totalorder %s29, 0
      %p114 = por %p112, %p113
      %p115 = scmp.ne.s32.totalorder %s101, %s102
      %p116 = scmp.eq.s32.totalorder %s30, 3
      %p117 = por %p115, %p116
      %p119 = scmp.ne.s32.totalorder %s102, %s118
      %p120 = scmp.eq.s32.totalorder %s30, 0
      %p121 = por %p119, %p120
      %s122 = ssub.s32 %s32, %s39
      %p123 = scmp.eq.s32.totalorder %s122, 0
      %s125 = sadd.s32 %s124, 1
      %s126 = scalar_select %p123, %s124, %s125
      %p129 = pneg %p123
      %p130 = scmp.eq.s32.totalorder %s24, 3
      %p131 = por %p129, %p130
      %p132 = scmp.ne.s32.totalorder %s124, %s127
      %p133 = scmp.eq.s32.totalorder %s24, 0
      %p134 = por %p132, %p133
      %p135 = scmp.ne.s32.totalorder %s124, %s127
      %p136 = scmp.eq.s32.totalorder %s29, 3
      %p137 = por %p135, %p136
      %p138 = scmp.ne.s32.totalorder %s127, %s128
      %p139 = scmp.eq.s32.totalorder %s29, 0
      %p140 = por %p138, %p139
      %p141 = scmp.ne.s32.totalorder %s127, %s128
      %p142 = scmp.eq.s32.totalorder %s30, 3
      %p143 = por %p141, %p142
      %p145 = scmp.ne.s32.totalorder %s128, %s144
      %p146 = scmp.eq.s32.totalorder %s30, 0
      %p147 = por %p145, %p146
      %s149 = sadd.s32 %s148, 1
      %p152 = scmp.eq.s32.totalorder %s24, 3
      %p153 = scmp.ne.s32.totalorder %s148, %s150
      %p154 = scmp.eq.s32.totalorder %s24, 0
      %p155 = por %p153, %p154
      %p156 = scmp.ne.s32.totalorder %s148, %s150
      %p157 = scmp.eq.s32.totalorder %s29, 3
      %p158 = por %p156, %p157
      %p159 = scmp.ne.s32.totalorder %s150, %s151
      %p160 = scmp.eq.s32.totalorder %s29, 0
      %p161 = por %p159, %p160
      %p162 = scmp.ne.s32.totalorder %s150, %s151
      %p163 = scmp.eq.s32.totalorder %s30, 3
      %p164 = por %p162, %p163
      %p166 = scmp.ne.s32.totalorder %s151, %s165
      %p167 = scmp.eq.s32.totalorder %s30, 0
      %p168 = por %p166, %p167
      %s170 = sadd.s32 %s169, 1
      %p173 = scmp.eq.s32.totalorder %s24, 3
      %p174 = scmp.ne.s32.totalorder %s169, %s171
      %p175 = scmp.eq.s32.totalorder %s24, 0
      %p176 = por %p174, %p175
      %p177 = scmp.ne.s32.totalorder %s169, %s171
      %p178 = scmp.eq.s32.totalorder %s29, 3
      %p179 = por %p177, %p178
      %p180 = scmp.ne.s32.totalorder %s171, %s172
      %p181 = scmp.eq.s32.totalorder %s29, 0
      %p182 = por %p180, %p181
      %p183 = scmp.ne.s32.totalorder %s171, %s172
      %p184 = scmp.eq.s32.totalorder %s30, 3
      %p185 = por %p183, %p184
      %p187 = scmp.ne.s32.totalorder %s172, %s186
      %p188 = scmp.eq.s32.totalorder %s30, 0
      %p189 = por %p187, %p188
      %s191 = sadd.s32 %s190, 1
      %p194 = scmp.eq.s32.totalorder %s24, 3
      %p195 = scmp.ne.s32.totalorder %s190, %s192
      %p196 = scmp.eq.s32.totalorder %s24, 0
      %p197 = por %p195, %p196
      %p198 = scmp.ne.s32.totalorder %s190, %s192
      %p199 = scmp.eq.s32.totalorder %s29, 3
      %p200 = por %p198, %p199
      %p201 = scmp.ne.s32.totalorder %s192, %s193
      %p202 = scmp.eq.s32.totalorder %s29, 0
      %p203 = por %p201, %p202
      %p204 = scmp.ne.s32.totalorder %s192, %s193
      %p205 = scmp.eq.s32.totalorder %s30, 3
      %p206 = por %p204, %p205
      %p208 = scmp.ne.s32.totalorder %s193, %s207
      %p209 = scmp.eq.s32.totalorder %s30, 0
      %p210 = por %p208, %p209
      %s212 = sadd.s32 %s211, 1
      %p215 = scmp.eq.s32.totalorder %s24, 3
      %p216 = scmp.ne.s32.totalorder %s211, %s213
      %p217 = scmp.eq.s32.totalorder %s24, 0
      %p218 = por %p216, %p217
      %p219 = scmp.ne.s32.totalorder %s211, %s213
      %p220 = scmp.eq.s32.totalorder %s29, 3
      %p221 = por %p219, %p220
      %p222 = scmp.ne.s32.totalorder %s213, %s214
      %p223 = scmp.eq.s32.totalorder %s29, 0
      %p224 = por %p222, %p223
      %p225 = scmp.ne.s32.totalorder %s213, %s214
      %p226 = scmp.eq.s32.totalorder %s30, 3
      %p227 = por %p225, %p226
      %p229 = scmp.ne.s32.totalorder %s214, %s228
      %p230 = scmp.eq.s32.totalorder %s30, 0
      %p231 = por %p229, %p230
      %s233 = sadd.s32 %s232, 1
      %p236 = scmp.eq.s32.totalorder %s24, 3
      %p237 = scmp.ne.s32.totalorder %s232, %s234
      %p238 = scmp.eq.s32.totalorder %s24, 0
      %p239 = por %p237, %p238
      %p240 = scmp.ne.s32.totalorder %s232, %s234
      %p241 = scmp.eq.s32.totalorder %s29, 3
      %p242 = por %p240, %p241
      %p243 = scmp.ne.s32.totalorder %s234, %s235
      %p244 = scmp.eq.s32.totalorder %s29, 0
      %p245 = por %p243, %p244
      %p246 = scmp.ne.s32.totalorder %s234, %s235
      %p247 = scmp.eq.s32.totalorder %s30, 3
      %p248 = por %p246, %p247
      %p250 = scmp.ne.s32.totalorder %s235, %s249
      %p251 = scmp.eq.s32.totalorder %s30, 0
      %p252 = por %p250, %p251
      %s253 = ssub.s32 %s31, %s43
      %p254 = scmp.eq.s32.totalorder %s253, 0
      %s256 = sadd.s32 %s255, 1
      %s257 = scalar_select %p254, %s255, %s256
      %p260 = pneg %p254
      %p261 = scmp.eq.s32.totalorder %s24, 3
      %p262 = por %p260, %p261
      %p263 = scmp.ne.s32.totalorder %s255, %s258
      %p264 = scmp.eq.s32.totalorder %s24, 0
      %p265 = por %p263, %p264
      %p266 = scmp.ne.s32.totalorder %s255, %s258
      %p267 = scmp.eq.s32.totalorder %s29, 3
      %p268 = por %p266, %p267
      %p269 = scmp.ne.s32.totalorder %s258, %s259
      %p270 = scmp.eq.s32.totalorder %s29, 0
      %p271 = por %p269, %p270
      %p272 = scmp.ne.s32.totalorder %s258, %s259
      %p273 = scmp.eq.s32.totalorder %s30, 3
      %p274 = por %p272, %p273
      %p276 = scmp.ne.s32.totalorder %s259, %s275
      %p277 = scmp.eq.s32.totalorder %s30, 0
      %p278 = por %p276, %p277
      %p279 = scmp.le.s32.totalorder 1, %s24
      %p280 = scmp.lt.s32.totalorder %s24, 5
      %p281 = pnand %p279, %p280
      %p282 = pneg %p281
      // Predicated region
      $region9: #{tpu_custom_call.1} parent=5 // pred_check
        _
      $region10: #{tpu_custom_call.1} parent=5 // pred_check_branch
        %284 = sbr.rel (%p281) target = $region12
      $region11: #{tpu_custom_call.1} parent=5 // pred_region
        %s285 = ssub.s32 %s24, 1
        // Predicated region
        $region13: #{tpu_custom_call.1} parent=11 // pred_check
          %p286 = pneg %p161
        $region14: #{tpu_custom_call.1} parent=11 // pred_check_branch
          %288 = sbr.rel (%p286) target = $region16
        $region15: #{tpu_custom_call.1} parent=11 // pred_region
          _
        $region16: #{tpu_custom_call.1} parent=11 // pred_fallthru
          _
        // Predicated region
        $region17: #{tpu_custom_call.1} parent=11 // pred_check
          %p289 = pneg %p182
        $region18: #{tpu_custom_call.1} parent=11 // pred_check_branch
          %291 = sbr.rel (%p289) target = $region20
        $region19: #{tpu_custom_call.1} parent=11 // pred_region
          _
        $region20: #{tpu_custom_call.1} parent=11 // pred_fallthru
          _
        // Predicated region
        $region21: #{tpu_custom_call.1} parent=11 // pred_check
          %p292 = pneg %p203
        $region22: #{tpu_custom_call.1} parent=11 // pred_check_branch
          %294 = sbr.rel (%p292) target = $region24
        $region23: #{tpu_custom_call.1} parent=11 // pred_region
          _
        $region24: #{tpu_custom_call.1} parent=11 // pred_fallthru
          _
        // Predicated region
        $region25: #{tpu_custom_call.1} parent=11 // pred_check
          %p295 = pneg %p224
        $region26: #{tpu_custom_call.1} parent=11 // pred_check_branch
          %297 = sbr.rel (%p295) target = $region28
        $region27: #{tpu_custom_call.1} parent=11 // pred_region
          _
        $region28: #{tpu_custom_call.1} parent=11 // pred_fallthru
          _
        // Predicated region
        $region29: #{tpu_custom_call.1} parent=11 // pred_check
          %p298 = pneg %p245
        $region30: #{tpu_custom_call.1} parent=11 // pred_check_branch
          %300 = sbr.rel (%p298) target = $region32
        $region31: #{tpu_custom_call.1} parent=11 // pred_region
          _
        $region32: #{tpu_custom_call.1} parent=11 // pred_fallthru
          _
      $region12: #{tpu_custom_call.1} parent=5 // pred_fallthru
        _
      %p301 = scmp.lt.s32.totalorder %s24, 4
      // Predicated region
      $region33: #{tpu_custom_call.1} parent=5 // pred_check
        %p302 = pneg %p301
      $region34: #{tpu_custom_call.1} parent=5 // pred_check_branch
        %304 = sbr.rel (%p302) target = $region36
      $region35: #{tpu_custom_call.1} parent=5 // pred_region
        // Predicated region
        $region37: #{tpu_custom_call.1} parent=35 // pred_check
          %p305 = pneg %p56
        $region38: #{tpu_custom_call.1} parent=35 // pred_check_branch
          %307 = sbr.rel (%p305) target = $region40
        $region39: #{tpu_custom_call.1} parent=35 // pred_region
          %s308 = sand.u32 %s46, 1
          %s309 = scalar_lea.sflag [#allocation5], %s308
          %s310 = sand.u32 %s46, 1
          %s311 = smul.addr %s310, 16
          %s312 = scalar_lea.vmem [#allocation4], %s311
          %s314 = ssub.s32 256, 256
          %315 = vsyncadd %s309, %s314
          %s316 = smul.addr %s31, 2
          %s317 = smul.addr %s316, 128
          %s318 = scalar_lea.hbm %s0, %s317
          %s320 = sshll.u32 %s312, 4
          %s321 = int_to_ptr.vmem [resolvable:$true] %s320
          %323 = dma.hbm_to_vmem [thread:$0]  %s318, 256, %s321, %s309
        $region40: #{tpu_custom_call.1} parent=35 // pred_fallthru
          _
        // Predicated region
        $region41: #{tpu_custom_call.1} parent=35 // pred_check
          %p324 = pneg %p82
        $region42: #{tpu_custom_call.1} parent=35 // pred_check_branch
          %326 = sbr.rel (%p324) target = $region44
        $region43: #{tpu_custom_call.1} parent=35 // pred_region
          %s327 = sand.u32 %s24, 1
          %s328 = scalar_lea.sflag [#allocation8], %s327
          %s329 = sand.u32 %s72, 1
          %s330 = smul.addr %s329, 256
          %s331 = scalar_lea.vmem [#allocation7], %s330
          %s332 = smul.u32 2, %s32
          %s334 = ssub.s32 4096, 4096
          %335 = vsyncadd %s328, %s334
          %s336 = smul.addr %s332, 64
          %s337 = scalar_lea.hbm %s1, %s336
          %s338 = sshll.u32 %s331, 4
          %s339 = int_to_ptr.vmem [resolvable:$true] %s338
          %344 = dma.hbm_to_vmem [thread:$0]  %s337, 4096, %s339, %s328, 256, 128, 8
        $region44: #{tpu_custom_call.1} parent=35 // pred_fallthru
          _
        // Predicated region
        $region45: #{tpu_custom_call.1} parent=35 // pred_check
          %p345 = pneg %p108
        $region46: #{tpu_custom_call.1} parent=35 // pred_check_branch
          %347 = sbr.rel (%p345) target = $region48
        $region47: #{tpu_custom_call.1} parent=35 // pred_region
          %s348 = smul.u32 2, %s32
          %p349 = scmp.lt.s32.totalorder %s348, 3
          %s350 = scalar_select %p349, %s348, 3
          %s351 = scalar_lea.vmem %s2, %s350
          %s352 = smul.u32 2, %s32
        $region48: #{tpu_custom_call.1} parent=35 // pred_fallthru
          _
        // Predicated region
        $region49: #{tpu_custom_call.1} parent=35 // pred_check
          %p353 = pneg %p134
        $region50: #{tpu_custom_call.1} parent=35 // pred_check_branch
          %355 = sbr.rel (%p353) target = $region52
        $region51: #{tpu_custom_call.1} parent=35 // pred_region
          %s356 = sand.u32 %s24, 1
          %s357 = scalar_lea.sflag [#allocation8], %s356
          %s358 = sand.u32 %s124, 1
          %s359 = smul.addr %s358, 256
          %s360 = scalar_lea.vmem [#allocation9], %s359
          %s361 = smul.u32 32, %s32
          %s363 = ssub.s32 4096, 4096
          %364 = vsyncadd %s357, %s363
          %s365 = smul.addr %s361, 2
          %s366 = smul.addr %s365, 64
          %s367 = scalar_lea.hbm %s3, %s366
          %s368 = sshll.u32 %s360, 4
          %s369 = int_to_ptr.vmem [resolvable:$true] %s368
          %374 = dma.hbm_to_vmem [thread:$0]  %s367, 4096, %s369, %s357, 128, 128, 8
        $region52: #{tpu_custom_call.1} parent=35 // pred_fallthru
          _
      $region36: #{tpu_custom_call.1} parent=5 // pred_fallthru
        _
      %p375 = scmp.le.s32.totalorder 1, %s24
      %p376 = scmp.lt.s32.totalorder %s24, 5
      %p377 = pnand %p375, %p376
      %p378 = pneg %p377
      // Predicated region
      $region53: #{tpu_custom_call.1} parent=5 // pred_check
        _
      $region54: #{tpu_custom_call.1} parent=5 // pred_check_branch
        %380 = sbr.rel (%p377) target = $region56
      $region55: #{tpu_custom_call.1} parent=5 // pred_region
        %s381 = ssub.s32 %s24, 1
        %s382 = sand.u32 %s49, 1
        %s383 = scalar_lea.sflag [#allocation5], %s382
        %s384 = sand.u32 %s49, 1
        %s385 = smul.addr %s384, 16
        %s386 = scalar_lea.vmem [#allocation4], %s385
        // Predicated region
        $region57: #{tpu_custom_call.1} parent=55 // pred_check
          %p387 = pneg %p62
        $region58: #{tpu_custom_call.1} parent=55 // pred_check_branch
          %389 = sbr.rel (%p387) target = $region60
        $region59: #{tpu_custom_call.1} parent=55 // pred_region
          %390 = dma.done %s383, 256
        $region60: #{tpu_custom_call.1} parent=55 // pred_fallthru
          _
        %s391 = sand.u32 %s29, 1
        %s392 = scalar_lea.sflag [#allocation8], %s391
        %s393 = sand.u32 %s75, 1
        %s394 = smul.addr %s393, 256
        %s395 = scalar_lea.vmem [#allocation7], %s394
        // Predicated region
        $region61: #{tpu_custom_call.1} parent=55 // pred_check
          %p396 = pneg %p88
        $region62: #{tpu_custom_call.1} parent=55 // pred_check_branch
          %398 = sbr.rel (%p396) target = $region64
        $region63: #{tpu_custom_call.1} parent=55 // pred_region
          %399 = dma.done %s392, 4096
        $region64: #{tpu_custom_call.1} parent=55 // pred_fallthru
          _
        %s400 = sand.u32 %s29, 1
        %s401 = scalar_lea.sflag [#allocation8], %s400
        %s402 = sand.u32 %s127, 1
        %s403 = smul.addr %s402, 256
        %s404 = scalar_lea.vmem [#allocation9], %s403
        // Predicated region
        $region65: #{tpu_custom_call.1} parent=55 // pred_check
          %p405 = pneg %p140
        $region66: #{tpu_custom_call.1} parent=55 // pred_check_branch
          %407 = sbr.rel (%p405) target = $region68
        $region67: #{tpu_custom_call.1} parent=55 // pred_region
          %408 = dma.done %s401, 4096
        $region68: #{tpu_custom_call.1} parent=55 // pred_fallthru
          _
        %s409 = sand.u32 %s49, 1
        %s410 = scalar_lea.sflag [#allocation5], %s409
        %s411 = sand.u32 %s49, 1
        %s412 = smul.addr %s411, 16
        %s413 = scalar_lea.vmem [#allocation4], %s412
        %p414 = pneg %p62
        %p415 = pneg %p59
        %s416 = sand.u32 %s29, 1
        %s417 = scalar_lea.sflag [#allocation8], %s416
        %s418 = sand.u32 %s75, 1
        %s419 = smul.addr %s418, 256
        %s420 = scalar_lea.vmem [#allocation7], %s419
        %p421 = pneg %p88
        %p422 = pneg %p85
        %s423 = smul.u32 2, %s34
        %p424 = scmp.lt.s32.totalorder %s423, 3
        %s425 = scalar_select %p424, %s423, 3
        %s426 = scalar_lea.vmem %s2, %s425
        %p427 = pneg %p114
        %p428 = pneg %p111
        %s429 = sand.u32 %s29, 1
        %s430 = scalar_lea.sflag [#allocation8], %s429
        %s431 = sand.u32 %s127, 1
        %s432 = smul.addr %s431, 256
        %s433 = scalar_lea.vmem [#allocation9], %s432
        %p434 = pneg %p140
        %p435 = pneg %p137
        %p436 = pneg %p161
        %p437 = pneg %p158
        %p438 = pneg %p182
        %p439 = pneg %p179
        %p440 = pneg %p203
        %p441 = pneg %p200
        %p442 = pneg %p224
        %p443 = pneg %p221
        %p444 = pneg %p245
        %p445 = pneg %p242
        %p446 = pneg %p271
        %p447 = pneg %p268
        %s448 = sand.u32 %s258, 1
        %s449 = scalar_lea.sflag [#allocation6], %s448
        %s450 = sand.u32 %s258, 1
        %s451 = smul.addr %s450, 16
        %s452 = scalar_lea.vmem [#allocation10], %s451
        %s453 = smul.u32 2, %s34
        %s454 = smul.u32 2, %s34
        %p455 = scmp.lt.s32.totalorder %s454, 3
        %s456 = scalar_select %p455, %s454, 3
        %s457 = scalar_lea.vmem %s2, %s456
        %s458 = smul.u32 2, %s34
        %s459 = smul.u32 32, %s34
        %p460 = scmp.eq.s32.totalorder %s34, 0
        // Predicated region
        $region69: #{tpu_custom_call.1} parent=55 // pred_check
          %p461 = pneg %p460
        $region70: #{tpu_custom_call.1} parent=55 // pred_check_branch
          %463 = sbr.rel (%p461) target = $region72
        $region71: #{tpu_custom_call.1} parent=55 // pred_region
          %v464 = vld [vmem:[%s386] sm:$0xff]
          %v465 = vld [vmem:[%s386 + $0x8] sm:$0xff]
          %v466 = vadd.f32 %v464, %v464
          %v467 = vadd.f32 %v465, %v465
          %v468 = vadd.f32 %v466, %v467
          %469 = vadd.xlane.f32.xlu0 %v468
          %v470 = vpop.xlane.xlu0 %469
          %v471 = vrcp.pop 256.0
          %v472 = vmul.f32 %v470, %v471
          %v473 = vsub.f32 %v466, %v472
          %v474 = vsub.f32 %v467, %v472
          %v475 = vmul.f32 %v473, %v473
          %v476 = vmul.f32 %v474, %v474
          %v477 = vadd.f32 %v475, %v476
          %478 = vadd.xlane.f32.xlu0 %v477
          %v479 = vpop.xlane.xlu0 %478
          %v480 = vmul.f32 %v479, %v471
          %v481 = vld [vmem:[%s5] sm:$0x3]
          %v482 = vld [vmem:[%s6] sm:$0x3]
          %v483 = vadd.f32 %v480, 1e-05
          %v484 = vrsqrt.pop %v483
          %v485 = vmul.f32 %v473, %v484
          %v486 = vmul.f32 %v474, %v484
          %v488 = vlaneseq
          %v489 = vshrl.u32 %v488, 7
          %v490 = vsub.s32 0, %v489
          %v491 = vrot.slane %v481, %v490
          %v492 = vlaneseq
          %v493 = vshrl.u32 %v492, 7
          %v494 = vsub.s32 1, %v493
          %v495 = vrot.slane %v481, %v494
          %v498 = vmul.f32 %v485, %v491
          %v499 = vmul.f32 %v486, %v495
          %v501 = vlaneseq
          %v502 = vshrl.u32 %v501, 7
          %v503 = vsub.s32 0, %v502
          %v504 = vrot.slane %v482, %v503
          %v505 = vlaneseq
          %v506 = vshrl.u32 %v505, 7
          %v507 = vsub.s32 1, %v506
          %v508 = vrot.slane %v482, %v507
          %v511 = vadd.f32 %v498, %v504
          %v512 = vadd.f32 %v499, %v508
          %513 = vst [vmem:[#allocation2] sm:$0xff] %v511
          %514 = vst [vmem:[#allocation2 + $0x8] sm:$0xff] %v512
          %515 = vst [vmem:[#allocation3] sm:$0xff] 0.0
          %516 = vst [vmem:[#allocation3 + $0x8] sm:$0xff] 0.0
        $region72: #{tpu_custom_call.1} parent=55 // pred_fallthru
          _
        %v517 = vld [vmem:[#allocation2] sm:$0xff]
        %v518 = vld [vmem:[#allocation2 + $0x8] sm:$0xff]
        %v519 = vpack.c.bf16 %v517, %v517
        %v520 = vpack.c.bf16 %v518, %v518
        %v521 = vld [vmem:[%s457] sm:$0x3]
        %v522 = vunpack.c.l.bf16 %v521
        %v523 = vld [vmem:[%s395] sm:$0xff]
        %v524 = vld [vmem:[%s395 + $0x8] sm:$0xff]
        %v525 = vld [vmem:[%s395 + $0x10] sm:$0xff]
        %v526 = vld [vmem:[%s395 + $0x18] sm:$0xff]
        %v527 = vld [vmem:[%s395 + $0x20] sm:$0xff]
        %v528 = vld [vmem:[%s395 + $0x28] sm:$0xff]
        %v529 = vld [vmem:[%s395 + $0x30] sm:$0xff]
        %v530 = vld [vmem:[%s395 + $0x38] sm:$0xff]
        %v531 = vld [vmem:[%s395 + $0x40] sm:$0xff]
        %v532 = vld [vmem:[%s395 + $0x48] sm:$0xff]
        %v533 = vld [vmem:[%s395 + $0x50] sm:$0xff]
        %v534 = vld [vmem:[%s395 + $0x58] sm:$0xff]
        %v535 = vld [vmem:[%s395 + $0x60] sm:$0xff]
        %v536 = vld [vmem:[%s395 + $0x68] sm:$0xff]
        %v537 = vld [vmem:[%s395 + $0x70] sm:$0xff]
        %v538 = vld [vmem:[%s395 + $0x78] sm:$0xff]
        %v539 = vld [vmem:[%s395 + $0x80] sm:$0xff]
        %v540 = vld [vmem:[%s395 + $0x88] sm:$0xff]
        %v541 = vld [vmem:[%s395 + $0x90] sm:$0xff]
        %v542 = vld [vmem:[%s395 + $0x98] sm:$0xff]
        %v543 = vld [vmem:[%s395 + $0xa0] sm:$0xff]
        %v544 = vld [vmem:[%s395 + $0xa8] sm:$0xff]
        %v545 = vld [vmem:[%s395 + $0xb0] sm:$0xff]
        %v546 = vld [vmem:[%s395 + $0xb8] sm:$0xff]
        %v547 = vld [vmem:[%s395 + $0xc0] sm:$0xff]
        %v548 = vld [vmem:[%s395 + $0xc8] sm:$0xff]
        %v549 = vld [vmem:[%s395 + $0xd0] sm:$0xff]
        %v550 = vld [vmem:[%s395 + $0xd8] sm:$0xff]
        %v551 = vld [vmem:[%s395 + $0xe0] sm:$0xff]
        %v552 = vld [vmem:[%s395 + $0xe8] sm:$0xff]
        %v553 = vld [vmem:[%s395 + $0xf0] sm:$0xff]
        %v554 = vld [vmem:[%s395 + $0xf8] sm:$0xff]
        %v556 = vlaneseq
        %v557 = vshrl.u32 %v556, 7
        %v558 = vsub.s32 0, %v557
        %v559 = vrot.slane %v522, %v558
        %v560 = vlaneseq
        %v561 = vshrl.u32 %v560, 7
        %v562 = vsub.s32 2, %v561
        %v563 = vrot.slane %v522, %v562
        %v566 = vlaneseq
        %v567 = vshrl.u32 %v566, 7
        %v568 = vsub.s32 0, %v567
        %v569 = vrot.slane %v559, %v568
        %v570 = vlaneseq
        %v571 = vshrl.u32 %v570, 7
        %v572 = vsub.s32 0, %v571
        %v573 = vrot.slane %v563, %v572
        %v606 = vunpack.c.l.b16 %v523
        %v607 = vunpack.c.h.b16 %v523
        %v608 = vunpack.c.l.b16 %v524
        %v609 = vunpack.c.h.b16 %v524
        %v610 = vunpack.c.l.b16 %v525
        %v611 = vunpack.c.h.b16 %v525
        %v612 = vunpack.c.l.b16 %v526
        %v613 = vunpack.c.h.b16 %v526
        %v614 = vunpack.c.l.b16 %v527
        %v615 = vunpack.c.h.b16 %v527
        %v616 = vunpack.c.l.b16 %v528
        %v617 = vunpack.c.h.b16 %v528
        %v618 = vunpack.c.l.b16 %v529
        %v619 = vunpack.c.h.b16 %v529
        %v620 = vunpack.c.l.b16 %v530
        %v621 = vunpack.c.h.b16 %v530
        %v622 = vunpack.c.l.b16 %v531
        %v623 = vunpack.c.h.b16 %v531
        %v624 = vunpack.c.l.b16 %v532
        %v625 = vunpack.c.h.b16 %v532
        %v626 = vunpack.c.l.b16 %v533
        %v627 = vunpack.c.h.b16 %v533
        %v628 = vunpack.c.l.b16 %v534
        %v629 = vunpack.c.h.b16 %v534
        %v630 = vunpack.c.l.b16 %v535
        %v631 = vunpack.c.h.b16 %v535
        %v632 = vunpack.c.l.b16 %v536
        %v633 = vunpack.c.h.b16 %v536
        %v634 = vunpack.c.l.b16 %v537
        %v635 = vunpack.c.h.b16 %v537
        %v636 = vunpack.c.l.b16 %v538
        %v637 = vunpack.c.h.b16 %v538
        %v638 = vunpack.c.l.b16 %v539
        %v639 = vunpack.c.h.b16 %v539
        %v640 = vunpack.c.l.b16 %v540
        %v641 = vunpack.c.h.b16 %v540
        %v642 = vunpack.c.l.b16 %v541
        %v643 = vunpack.c.h.b16 %v541
        %v644 = vunpack.c.l.b16 %v542
        %v645 = vunpack.c.h.b16 %v542
        %v646 = vunpack.c.l.b16 %v543
        %v647 = vunpack.c.h.b16 %v543
        %v648 = vunpack.c.l.b16 %v544
        %v649 = vunpack.c.h.b16 %v544
        %v650 = vunpack.c.l.b16 %v545
        %v651 = vunpack.c.h.b16 %v545
        %v652 = vunpack.c.l.b16 %v546
        %v653 = vunpack.c.h.b16 %v546
        %v654 = vunpack.c.l.b16 %v547
        %v655 = vunpack.c.h.b16 %v547
        %v656 = vunpack.c.l.b16 %v548
        %v657 = vunpack.c.h.b16 %v548
        %v658 = vunpack.c.l.b16 %v549
        %v659 = vunpack.c.h.b16 %v549
        %v660 = vunpack.c.l.b16 %v550
        %v661 = vunpack.c.h.b16 %v550
        %v662 = vunpack.c.l.b16 %v551
        %v663 = vunpack.c.h.b16 %v551
        %v664 = vunpack.c.l.b16 %v552
        %v665 = vunpack.c.h.b16 %v552
        %v666 = vunpack.c.l.b16 %v553
        %v667 = vunpack.c.h.b16 %v553
        %v668 = vunpack.c.l.b16 %v554
        %v669 = vunpack.c.h.b16 %v554
        %v670 = vpack.c.b16 %v608, %v606
        %v671 = vpack.c.b16 %v609, %v607
        %v672 = vpack.c.b16 %v612, %v610
        %v673 = vpack.c.b16 %v613, %v611
        %v674 = vpack.c.b16 %v616, %v614
        %v675 = vpack.c.b16 %v617, %v615
        %v676 = vpack.c.b16 %v620, %v618
        %v677 = vpack.c.b16 %v621, %v619
        %v678 = vpack.c.b16 %v624, %v622
        %v679 = vpack.c.b16 %v625, %v623
        %v680 = vpack.c.b16 %v628, %v626
        %v681 = vpack.c.b16 %v629, %v627
        %v682 = vpack.c.b16 %v632, %v630
        %v683 = vpack.c.b16 %v633, %v631
        %v684 = vpack.c.b16 %v636, %v634
        %v685 = vpack.c.b16 %v637, %v635
        %v686 = vpack.c.b16 %v640, %v638
        %v687 = vpack.c.b16 %v641, %v639
        %v688 = vpack.c.b16 %v644, %v642
        %v689 = vpack.c.b16 %v645, %v643
        %v690 = vpack.c.b16 %v648, %v646
        %v691 = vpack.c.b16 %v649, %v647
        %v692 = vpack.c.b16 %v652, %v650
        %v693 = vpack.c.b16 %v653, %v651
        %v694 = vpack.c.b16 %v656, %v654
        %v695 = vpack.c.b16 %v657, %v655
        %v696 = vpack.c.b16 %v660, %v658
        %v697 = vpack.c.b16 %v661, %v659
        %v698 = vpack.c.b16 %v664, %v662
        %v699 = vpack.c.b16 %v665, %v663
        %v700 = vpack.c.b16 %v668, %v666
        %v701 = vpack.c.b16 %v669, %v667
        %734 = vmatprep.subr.bf16.mxu0 %v671
        %735 = vmatpush1.bf16.msra.mxu0 %v670
        %736 = vmatprep.subr.bf16.mxu0 %v673
        %737 = vmatpush1.bf16.msra.mxu0 %v672
        %738 = vmatprep.subr.bf16.mxu0 %v675
        %739 = vmatpush1.bf16.msra.mxu0 %v674
        %740 = vmatprep.subr.bf16.mxu0 %v677
        %741 = vmatpush1.bf16.msra.mxu0 %v676
        %742 = vmatprep.subr.bf16.mxu0 %v679
        %743 = vmatpush1.bf16.msra.mxu0 %v678
        %744 = vmatprep.subr.bf16.mxu0 %v681
        %745 = vmatpush1.bf16.msra.mxu0 %v680
        %746 = vmatprep.subr.bf16.mxu0 %v683
        %747 = vmatpush1.bf16.msra.mxu0 %v682
        %748 = vmatprep.subr.bf16.mxu0 %v685
        %749 = vmatpush1.bf16.msra.mxu0 %v684
        %750 = vmatprep.subr.bf16.mxu0 %v687
        %751 = vmatpush1.bf16.msra.mxu0 %v686
        %752 = vmatprep.subr.bf16.mxu0 %v689
        %753 = vmatpush1.bf16.msra.mxu0 %v688
        %754 = vmatprep.subr.bf16.mxu0 %v691
        %755 = vmatpush1.bf16.msra.mxu0 %v690
        %756 = vmatprep.subr.bf16.mxu0 %v693
        %757 = vmatpush1.bf16.msra.mxu0 %v692
        %758 = vmatprep.subr.bf16.mxu0 %v695
        %759 = vmatpush1.bf16.msra.mxu0 %v694
        %760 = vmatprep.subr.bf16.mxu0 %v697
        %761 = vmatpush1.bf16.msra.mxu0 %v696
        %762 = vmatprep.subr.bf16.mxu0 %v699
        %763 = vmatpush1.bf16.msra.mxu0 %v698
        %764 = vmatprep.subr.bf16.mxu0 %v701
        %765 = vmatpush1.bf16.msra.mxu0 %v700
        %766 = vmatprep.mubr.bf16.mxu0 %v520
        %767 = vmatmul.mubr.bf16.gmra.mrb[0].mxu0 %v519
        %v768 = vpop.f32.mrb[0].mxu0
        %v769 = vadd.f32 %v569, %v768
        %v770 = vpop.f32.mrb[0].mxu0
        %v771 = vadd.f32 %v573, %v770
        %v772 = vpop.f32.mrb[0].mxu0
        %v773 = vpop.f32.mrb[0].mxu0
        %774 = vdwg.mxu0
        %v775 = vmax.f32 %v769, 0.0
        %v776 = vmax.f32 %v771, 0.0
        %v777 = vld [vmem:[#allocation3] sm:$0xff]
        %v778 = vld [vmem:[#allocation3 + $0x8] sm:$0xff]
        %v779 = vpack.c.bf16 %v775, %v775
        %v780 = vpack.c.bf16 %v776, %v776
        %v781 = vld [vmem:[%s404] sm:$0xff]
        %v782 = vld [vmem:[%s404 + $0x8] sm:$0xff]
        %v783 = vld [vmem:[%s404 + $0x10] sm:$0xff]
        %v784 = vld [vmem:[%s404 + $0x18] sm:$0xff]
        %v785 = vld [vmem:[%s404 + $0x20] sm:$0xff]
        %v786 = vld [vmem:[%s404 + $0x28] sm:$0xff]
        %v787 = vld [vmem:[%s404 + $0x30] sm:$0xff]
        %v788 = vld [vmem:[%s404 + $0x38] sm:$0xff]
        %v789 = vld [vmem:[%s404 + $0x40] sm:$0xff]
        %v790 = vld [vmem:[%s404 + $0x48] sm:$0xff]
        %v791 = vld [vmem:[%s404 + $0x50] sm:$0xff]
        %v792 = vld [vmem:[%s404 + $0x58] sm:$0xff]
        %v793 = vld [vmem:[%s404 + $0x60] sm:$0xff]
        %v794 = vld [vmem:[%s404 + $0x68] sm:$0xff]
        %v795 = vld [vmem:[%s404 + $0x70] sm:$0xff]
        %v796 = vld [vmem:[%s404 + $0x78] sm:$0xff]
        %v797 = vld [vmem:[%s404 + $0x80] sm:$0xff]
        %v798 = vld [vmem:[%s404 + $0x88] sm:$0xff]
        %v799 = vld [vmem:[%s404 + $0x90] sm:$0xff]
        %v800 = vld [vmem:[%s404 + $0x98] sm:$0xff]
        %v801 = vld [vmem:[%s404 + $0xa0] sm:$0xff]
        %v802 = vld [vmem:[%s404 + $0xa8] sm:$0xff]
        %v803 = vld [vmem:[%s404 + $0xb0] sm:$0xff]
        %v804 = vld [vmem:[%s404 + $0xb8] sm:$0xff]
        %v805 = vld [vmem:[%s404 + $0xc0] sm:$0xff]
        %v806 = vld [vmem:[%s404 + $0xc8] sm:$0xff]
        %v807 = vld [vmem:[%s404 + $0xd0] sm:$0xff]
        %v808 = vld [vmem:[%s404 + $0xd8] sm:$0xff]
        %v809 = vld [vmem:[%s404 + $0xe0] sm:$0xff]
        %v810 = vld [vmem:[%s404 + $0xe8] sm:$0xff]
        %v811 = vld [vmem:[%s404 + $0xf0] sm:$0xff]
        %v812 = vld [vmem:[%s404 + $0xf8] sm:$0xff]
        %v845 = vunpack.c.l.b16 %v781
        %v846 = vunpack.c.h.b16 %v781
        %v847 = vunpack.c.l.b16 %v782
        %v848 = vunpack.c.h.b16 %v782
        %v849 = vunpack.c.l.b16 %v783
        %v850 = vunpack.c.h.b16 %v783
        %v851 = vunpack.c.l.b16 %v784
        %v852 = vunpack.c.h.b16 %v784
        %v853 = vunpack.c.l.b16 %v785
        %v854 = vunpack.c.h.b16 %v785
        %v855 = vunpack.c.l.b16 %v786
        %v856 = vunpack.c.h.b16 %v786
        %v857 = vunpack.c.l.b16 %v787
        %v858 = vunpack.c.h.b16 %v787
        %v859 = vunpack.c.l.b16 %v788
        %v860 = vunpack.c.h.b16 %v788
        %v861 = vunpack.c.l.b16 %v789
        %v862 = vunpack.c.h.b16 %v789
        %v863 = vunpack.c.l.b16 %v790
        %v864 = vunpack.c.h.b16 %v790
        %v865 = vunpack.c.l.b16 %v791
        %v866 = vunpack.c.h.b16 %v791
        %v867 = vunpack.c.l.b16 %v792
        %v868 = vunpack.c.h.b16 %v792
        %v869 = vunpack.c.l.b16 %v793
        %v870 = vunpack.c.h.b16 %v793
        %v871 = vunpack.c.l.b16 %v794
        %v872 = vunpack.c.h.b16 %v794
        %v873 = vunpack.c.l.b16 %v795
        %v874 = vunpack.c.h.b16 %v795
        %v875 = vunpack.c.l.b16 %v796
        %v876 = vunpack.c.h.b16 %v796
        %v877 = vunpack.c.l.b16 %v797
        %v878 = vunpack.c.h.b16 %v797
        %v879 = vunpack.c.l.b16 %v798
        %v880 = vunpack.c.h.b16 %v798
        %v881 = vunpack.c.l.b16 %v799
        %v882 = vunpack.c.h.b16 %v799
        %v883 = vunpack.c.l.b16 %v800
        %v884 = vunpack.c.h.b16 %v800
        %v885 = vunpack.c.l.b16 %v801
        %v886 = vunpack.c.h.b16 %v801
        %v887 = vunpack.c.l.b16 %v802
        %v888 = vunpack.c.h.b16 %v802
        %v889 = vunpack.c.l.b16 %v803
        %v890 = vunpack.c.h.b16 %v803
        %v891 = vunpack.c.l.b16 %v804
        %v892 = vunpack.c.h.b16 %v804
        %v893 = vunpack.c.l.b16 %v805
        %v894 = vunpack.c.h.b16 %v805
        %v895 = vunpack.c.l.b16 %v806
        %v896 = vunpack.c.h.b16 %v806
        %v897 = vunpack.c.l.b16 %v807
        %v898 = vunpack.c.h.b16 %v807
        %v899 = vunpack.c.l.b16 %v808
        %v900 = vunpack.c.h.b16 %v808
        %v901 = vunpack.c.l.b16 %v809
        %v902 = vunpack.c.h.b16 %v809
        %v903 = vunpack.c.l.b16 %v810
        %v904 = vunpack.c.h.b16 %v810
        %v905 = vunpack.c.l.b16 %v811
        %v906 = vunpack.c.h.b16 %v811
        %v907 = vunpack.c.l.b16 %v812
        %v908 = vunpack.c.h.b16 %v812
        %v909 = vpack.c.b16 %v847, %v845
        %v910 = vpack.c.b16 %v848, %v846
        %v911 = vpack.c.b16 %v851, %v849
        %v912 = vpack.c.b16 %v852, %v850
        %v913 = vpack.c.b16 %v855, %v853
        %v914 = vpack.c.b16 %v856, %v854
        %v915 = vpack.c.b16 %v859, %v857
        %v916 = vpack.c.b16 %v860, %v858
        %v917 = vpack.c.b16 %v863, %v861
        %v918 = vpack.c.b16 %v864, %v862
        %v919 = vpack.c.b16 %v867, %v865
        %v920 = vpack.c.b16 %v868, %v866
        %v921 = vpack.c.b16 %v871, %v869
        %v922 = vpack.c.b16 %v872, %v870
        %v923 = vpack.c.b16 %v875, %v873
        %v924 = vpack.c.b16 %v876, %v874
        %v925 = vpack.c.b16 %v879, %v877
        %v926 = vpack.c.b16 %v880, %v878
        %v927 = vpack.c.b16 %v883, %v881
        %v928 = vpack.c.b16 %v884, %v882
        %v929 = vpack.c.b16 %v887, %v885
        %v930 = vpack.c.b16 %v888, %v886
        %v931 = vpack.c.b16 %v891, %v889
        %v932 = vpack.c.b16 %v892, %v890
        %v933 = vpack.c.b16 %v895, %v893
        %v934 = vpack.c.b16 %v896, %v894
        %v935 = vpack.c.b16 %v899, %v897
        %v936 = vpack.c.b16 %v900, %v898
        %v937 = vpack.c.b16 %v903, %v901
        %v938 = vpack.c.b16 %v904, %v902
        %v939 = vpack.c.b16 %v907, %v905
        %v940 = vpack.c.b16 %v908, %v906
        %973 = vmatprep.subr.bf16.mxu0 %v910
        %974 = vmatpush1.bf16.msra.mxu0 %v909
        %975 = vmatprep.subr.bf16.mxu0 %v912
        %976 = vmatpush1.bf16.msra.mxu0 %v911
        %977 = vmatprep.subr.bf16.mxu0 %v914
        %978 = vmatpush1.bf16.msra.mxu0 %v913
        %979 = vmatprep.subr.bf16.mxu0 %v916
        %980 = vmatpush1.bf16.msra.mxu0 %v915
        %981 = vmatprep.subr.bf16.mxu0 %v918
        %982 = vmatpush1.bf16.msra.mxu0 %v917
        %983 = vmatprep.subr.bf16.mxu0 %v920
        %984 = vmatpush1.bf16.msra.mxu0 %v919
        %985 = vmatprep.subr.bf16.mxu0 %v922
        %986 = vmatpush1.bf16.msra.mxu0 %v921
        %987 = vmatprep.subr.bf16.mxu0 %v924
        %988 = vmatpush1.bf16.msra.mxu0 %v923
        %989 = vmatprep.subr.bf16.mxu0 %v926
        %990 = vmatpush1.bf16.msra.mxu0 %v925
        %991 = vmatprep.subr.bf16.mxu0 %v928
        %992 = vmatpush1.bf16.msra.mxu0 %v927
        %993 = vmatprep.subr.bf16.mxu0 %v930
        %994 = vmatpush1.bf16.msra.mxu0 %v929
        %995 = vmatprep.subr.bf16.mxu0 %v932
        %996 = vmatpush1.bf16.msra.mxu0 %v931
        %997 = vmatprep.subr.bf16.mxu0 %v934
        %998 = vmatpush1.bf16.msra.mxu0 %v933
        %999 = vmatprep.subr.bf16.mxu0 %v936
        %1000 = vmatpush1.bf16.msra.mxu0 %v935
        %1001 = vmatprep.subr.bf16.mxu0 %v938
        %1002 = vmatpush1.bf16.msra.mxu0 %v937
        %1003 = vmatprep.subr.bf16.mxu0 %v940
        %1004 = vmatpush1.bf16.msra.mxu0 %v939
        %1005 = vmatprep.mubr.bf16.mxu0 %v780
        %1006 = vmatmul.mubr.bf16.gmra.mrb[0].mxu0 %v779
        %v1007 = vpop.f32.mrb[0].mxu0
        %v1008 = vadd.f32 0.0, %v1007
        %v1009 = vpop.f32.mrb[0].mxu0
        %v1010 = vadd.f32 0.0, %v1009
        %v1011 = vpop.f32.mrb[0].mxu0
        %v1012 = vpop.f32.mrb[0].mxu0
        %1013 = vdwg.mxu0
        %v1014 = vadd.f32 %v777, %v1008
        %v1015 = vadd.f32 %v778, %v1010
        %1016 = vst [vmem:[#allocation3] sm:$0xff] %v1014
        %1017 = vst [vmem:[#allocation3 + $0x8] sm:$0xff] %v1015
        %p1018 = scmp.eq.s32.totalorder %s34, 1
        // Predicated region
        $region73: #{tpu_custom_call.1} parent=55 // pred_check
          %p1019 = pneg %p1018
        $region74: #{tpu_custom_call.1} parent=55 // pred_check_branch
          %1021 = sbr.rel (%p1019) target = $region76
        $region75: #{tpu_custom_call.1} parent=55 // pred_region
          %v1022 = vld [vmem:[%s4] sm:$0x3]
          %v1023 = vunpack.c.l.bf16 %v1022
          %v1024 = vld [vmem:[%s7] sm:$0x3]
          %v1025 = vld [vmem:[%s8] sm:$0x3]
          %v1026 = vld [vmem:[#allocation2] sm:$0xff]
          %v1027 = vld [vmem:[#allocation2 + $0x8] sm:$0xff]
          %v1028 = vld [vmem:[#allocation3] sm:$0xff]
          %v1029 = vld [vmem:[#allocation3 + $0x8] sm:$0xff]
          %v1030 = vadd.f32 %v1026, %v1028
          %v1031 = vadd.f32 %v1027, %v1029
          %v1033 = vlaneseq
          %v1034 = vshrl.u32 %v1033, 7
          %v1035 = vsub.s32 0, %v1034
          %v1036 = vrot.slane %v1023, %v1035
          %v1037 = vlaneseq
          %v1038 = vshrl.u32 %v1037, 7
          %v1039 = vsub.s32 2, %v1038
          %v1040 = vrot.slane %v1023, %v1039
          %v1043 = vlaneseq
          %v1044 = vshrl.u32 %v1043, 7
          %v1045 = vsub.s32 0, %v1044
          %v1046 = vrot.slane %v1036, %v1045
          %v1047 = vlaneseq
          %v1048 = vshrl.u32 %v1047, 7
          %v1049 = vsub.s32 0, %v1048
          %v1050 = vrot.slane %v1040, %v1049
          %v1051 = vadd.f32 %v1030, %v1046
          %v1052 = vadd.f32 %v1031, %v1050
          %v1053 = vadd.f32 %v1051, %v1052
          %1054 = vadd.xlane.f32.xlu0 %v1053
          %v1055 = vpop.xlane.xlu0 %1054
          %v1056 = vrcp.pop 256.0
          %v1057 = vmul.f32 %v1055, %v1056
          %v1058 = vsub.f32 %v1051, %v1057
          %v1059 = vsub.f32 %v1052, %v1057
          %v1060 = vmul.f32 %v1058, %v1058
          %v1061 = vmul.f32 %v1059, %v1059
          %v1062 = vadd.f32 %v1060, %v1061
          %1063 = vadd.xlane.f32.xlu0 %v1062
          %v1064 = vpop.xlane.xlu0 %1063
          %v1065 = vmul.f32 %v1064, %v1056
          %v1066 = vadd.f32 %v1065, 1e-05
          %v1067 = vrsqrt.pop %v1066
          %v1068 = vmul.f32 %v1058, %v1067
          %v1069 = vmul.f32 %v1059, %v1067
          %v1071 = vlaneseq
          %v1072 = vshrl.u32 %v1071, 7
          %v1073 = vsub.s32 0, %v1072
          %v1074 = vrot.slane %v1024, %v1073
          %v1075 = vlaneseq
          %v1076 = vshrl.u32 %v1075, 7
          %v1077 = vsub.s32 1, %v1076
          %v1078 = vrot.slane %v1024, %v1077
          %v1081 = vmul.f32 %v1068, %v1074
          %v1082 = vmul.f32 %v1069, %v1078
          %v1084 = vlaneseq
          %v1085 = vshrl.u32 %v1084, 7
          %v1086 = vsub.s32 0, %v1085
          %v1087 = vrot.slane %v1025, %v1086
          %v1088 = vlaneseq
          %v1089 = vshrl.u32 %v1088, 7
          %v1090 = vsub.s32 1, %v1089
          %v1091 = vrot.slane %v1025, %v1090
          %v1094 = vadd.f32 %v1081, %v1087
          %v1095 = vadd.f32 %v1082, %v1091
          %1096 = vst [vmem:[%s452] sm:$0xff] %v1094
          %1097 = vst [vmem:[%s452 + $0x8] sm:$0xff] %v1095
        $region76: #{tpu_custom_call.1} parent=55 // pred_fallthru
          _
        %s1098 = sand.u32 %s258, 1
        %s1099 = scalar_lea.sflag [#allocation6], %s1098
        %s1100 = sand.u32 %s258, 1
        %s1101 = smul.addr %s1100, 16
        %s1102 = scalar_lea.vmem [#allocation10], %s1101
        // Predicated region
        $region77: #{tpu_custom_call.1} parent=55 // pred_check
          %p1103 = pneg %p268
        $region78: #{tpu_custom_call.1} parent=55 // pred_check_branch
          %1105 = sbr.rel (%p1103) target = $region80
        $region79: #{tpu_custom_call.1} parent=55 // pred_region
          %s1107 = ssub.s32 256, 256
          %1108 = vsyncadd %s1099, %s1107
          %s1109 = smul.addr %s33, 2
          %s1110 = smul.addr %s1109, 128
          %s1111 = scalar_lea.hbm %s9, %s1110
          %s1113 = sshll.u32 %s1102, 4
          %s1114 = int_to_ptr.vmem [resolvable:$true] %s1113
          %1116 = dma.vmem_to_hbm [thread:$0]  %s1114, 256, %s1111, %s1099
        $region80: #{tpu_custom_call.1} parent=55 // pred_fallthru
          _
      $region56: #{tpu_custom_call.1} parent=5 // pred_fallthru
        _
      %p1117 = scmp.le.s32.totalorder 2, %s24
      // Predicated region
      $region81: #{tpu_custom_call.1} parent=5 // pred_check
        %p1118 = pneg %p1117
      $region82: #{tpu_custom_call.1} parent=5 // pred_check_branch
        %1120 = sbr.rel (%p1118) target = $region84
      $region83: #{tpu_custom_call.1} parent=5 // pred_region
        %s1121 = ssub.s32 %s24, 2
        // Predicated region
        $region85: #{tpu_custom_call.1} parent=83 // pred_check
          %p1122 = pneg %p274
        $region86: #{tpu_custom_call.1} parent=83 // pred_check_branch
          %1124 = sbr.rel (%p1122) target = $region88
        $region87: #{tpu_custom_call.1} parent=83 // pred_region
          %s1125 = sand.u32 %s259, 1
          %s1126 = scalar_lea.sflag [#allocation6], %s1125
          %s1127 = sand.u32 %s259, 1
          %s1128 = smul.addr %s1127, 16
          %s1129 = scalar_lea.vmem [#allocation10], %s1128
          %1130 = dma.done %s1126, 256
        $region88: #{tpu_custom_call.1} parent=83 // pred_fallthru
          _
      $region84: #{tpu_custom_call.1} parent=5 // pred_fallthru
        _
    $region6: #{tpu_custom_call.1} parent=1 // loop_footer
      %s28 = sadd.s32 1, %s24
    $region7: #{tpu_custom_call.1} parent=1 // loop_footer_branch
      %23 = sbr.rel target = $region3
    $region8: #{tpu_custom_call.1} parent=1 // loop_exit
      _
    %1131 = vsyncpa [#allocation5], 1
    %s1132 = scalar_lea.sflag [#allocation5], 1
    %1133 = vsyncpa %s1132, 1
    %1134 = vsyncpa [#allocation8], 1
    %s1135 = scalar_lea.sflag [#allocation8], 1
    %1136 = vsyncpa %s1135, 1
    %1137 = vsyncpa [#allocation6], 1
    %s1138 = scalar_lea.sflag [#allocation6], 1
    %1139 = vsyncpa %s1138, 1

</llo_original>
